<compile_context>
chip_gen: v6e
topology: v6e:2x2x1
jax: 0.10.0
libtpu: 0.0.40
codegen_flags: <defaults>
</compile_context>

<pallas_src>
import jax
import jax.numpy as jnp
from jax.experimental import pallas as pl
from jax.experimental.pallas import tpu as pltpu


def _float_subtract_kernel(x_ref, dc_ref, o_ref):
    # x_ref : (row_tile, lane_tile)  input (uint8 or anything castable to f32)
    # dc_ref: (row_tile, 1) float32  per-row constant, broadcast across lanes
    # o_ref : (row_tile, lane_tile)  float32
    o_ref[...] = x_ref[...].astype(jnp.float32) - dc_ref[...]


def _round_up(a, m):
    return ((a + m - 1) // m) * m


def _pick_tiles(R, L):
    """Pick (row_tile, lane_tile): lane_tile a 128-multiple, row_tile an
    8/32-multiple, output block ~2 MiB f32, and (when the shape allows) at
    least 2 grid blocks so v7x can shard across its 2 TensorCores."""
    # Lane tile: fixed 128-multiple, capped at the (128-rounded) full extent.
    lane_tile = min(2048, _round_up(L, 128))

    # Row tile: target ~2 MiB f32 output block, prefer multiples of 32
    # (uint8 packs 32 sublanes / vreg), floor at 8.
    target_rows = max(32, ((2 << 20) // (4 * lane_tile) // 32) * 32)
    row_tile = min(target_rows, _round_up(R, 32))
    row_tile = max(8, (row_tile // 8) * 8)

    # Guarantee >= 2 grid blocks when the input is big enough (v7x: 2 TCs).
    while pl.cdiv(R, row_tile) * pl.cdiv(L, lane_tile) < 2:
        new_rt = max(8, ((row_tile // 2) // 8) * 8)
        if new_rt < row_tile and pl.cdiv(R, new_rt) > pl.cdiv(R, row_tile):
            row_tile = new_rt
            continue
        new_lt = max(128, ((lane_tile // 2) // 128) * 128)
        if new_lt < lane_tile and pl.cdiv(L, new_lt) > pl.cdiv(L, lane_tile):
            lane_tile = new_lt
            continue
        break  # input too small to split further; single block is fine
    return row_tile, lane_tile


def float_subtract(x_nchw, dc_per_channel):
    """x_nchw: (N, C, H, W), any dtype castable to f32 (typically uint8 bytes).
    dc_per_channel: (C,) float32 constant to subtract (per-channel mean).
    Returns float32 (N, C, H, W): x.float() - dc (dc broadcast as (1,C,1,1))."""
    N, C, H, W = x_nchw.shape
    R, L = N * C, H * W

    x2d = x_nchw.reshape(R, L)
    # Row r of the slab corresponds to channel r % C.
    dc_rows = jnp.tile(dc_per_channel.astype(jnp.float32), N).reshape(R, 1)

    in_itemsize = jnp.dtype(x2d.dtype).itemsize
    row_tile, lane_tile = _pick_tiles(R, L)
    grid = (pl.cdiv(R, row_tile), pl.cdiv(L, lane_tile))

    # Real double-buffered VMEM footprint (dc block lane-pads to 128 lanes).
    block_in = row_tile * lane_tile * in_itemsize
    block_out = row_tile * lane_tile * 4
    block_dc = row_tile * 128 * 4
    vmem_needed = 2 * (block_in + block_out + block_dc)
    vmem_limit = int(max(vmem_needed + (4 << 20), 16 << 20))  # + scratch headroom

    cost = pl.CostEstimate(
        flops=R * L,
        transcendentals=0,
        bytes_accessed=R * L * (in_itemsize + 4) + 4 * R,
    )

    out = pl.pallas_call(
        _float_subtract_kernel,
        out_shape=jax.ShapeDtypeStruct((R, L), jnp.float32),
        grid_spec=pltpu.PrefetchScalarGridSpec(
            num_scalar_prefetch=0,
            grid=grid,
            in_specs=[
                # big lane-dense streaming blocks (ragged edges padded by Pallas)
                pl.BlockSpec((row_tile, lane_tile), lambda i, j: (i, j)),
                # dc: plain tiled (row_tile, 1) block; only re-fetched when i changes
                pl.BlockSpec((row_tile, 1), lambda i, j: (i, 0)),
            ],
            out_specs=pl.BlockSpec((row_tile, lane_tile), lambda i, j: (i, j)),
        ),
        compiler_params=pltpu.CompilerParams(
            dimension_semantics=("parallel", "parallel"),
            vmem_limit_bytes=vmem_limit,
        ),
        cost_estimate=cost,
    )(x2d, dc_rows)
    return out.reshape(N, C, H, W)


if __name__ == "__main__":
    key = jax.random.PRNGKey(0)
    N, C, H, W = 2, 4, 16, 16

    # Deterministic "byte" image input (the module passes bytes; .float() expands).
    kx, kd = jax.random.split(key)
    x = jax.random.randint(kx, (N, C, H, W), 0, 256, dtype=jnp.int32).astype(jnp.uint8)

    # Deterministic per-channel constant dc ((C,) broadcast as (1, C, 1, 1)).
    dc = jax.random.uniform(kd, (C,), dtype=jnp.float32) * 255.0

    out = float_subtract(x, dc)
    out = jax.block_until_ready(out)

    # Reference: x.float() - dc
    ref = x.astype(jnp.float32) - dc.reshape(1, C, 1, 1)
    assert out.shape == (N, C, H, W)
    assert out.dtype == jnp.float32
    assert jnp.allclose(out, ref), "mismatch vs. reference"

    print("KERNEL_OK")
</pallas_src>

<mosaic_0001>
module attributes {stable_mosaic.version = 11 : i64} {
  func.func @_float_subtract_kernel(%arg0: i32, %arg1: i32, %arg2: memref<32x128xi8, #tpu.memory_space<vmem>>, %arg3: memref<32x1xf32, #tpu.memory_space<vmem>>, %arg4: memref<32x128xf32, #tpu.memory_space<vmem>>) attributes {dimension_semantics = [#tpu.dimension_semantics<parallel>, #tpu.dimension_semantics<parallel>], iteration_bounds = array<i64: 1, 2>, scalar_prefetch = 0 : i64, scratch_operands = 0 : i64, tpu.core_type = #tpu.core_type<tc>, window_params = [{transform_indices = @transform_0, window_bounds = array<i64: 32, 128>}, {transform_indices = @transform_1, window_bounds = array<i64: 32, 1>}, {transform_indices = @transform_2, window_bounds = array<i64: 32, 128>}]} {
    %c0 = arith.constant 0 : index
    %c0_0 = arith.constant 0 : index
    %0 = vector.load %arg2[%c0, %c0_0] : memref<32x128xi8, #tpu.memory_space<vmem>>, vector<32x128xi8>
    %1 = arith.uitofp %0 : vector<32x128xi8> to vector<32x128xf32>
    %c0_1 = arith.constant 0 : index
    %c0_2 = arith.constant 0 : index
    %2 = vector.load %arg3[%c0_1, %c0_2] : memref<32x1xf32, #tpu.memory_space<vmem>>, vector<32x1xf32>
    %3 = vector.broadcast %2 : vector<32x1xf32> to vector<32x128xf32>
    %4 = arith.subf %1, %3 : vector<32x128xf32>
    %c0_3 = arith.constant 0 : index
    %c0_4 = arith.constant 0 : index
    %5 = vector.load %arg4[%c0_3, %c0_4] : memref<32x128xf32, #tpu.memory_space<vmem>>, vector<32x128xf32>
    tpu.vector_store %arg4[%c0_3, %c0_4], %4 {strides = array<i32>} : memref<32x128xf32, #tpu.memory_space<vmem>>, vector<32x128xf32>,
    return
  }
  func.func @transform_0(%arg0: i32, %arg1: i32) -> (i32, i32) {
    %c0_i32 = arith.constant 0 : i32
    return %arg0, %arg1 : i32, i32
  }
  func.func @transform_1(%arg0: i32, %arg1: i32) -> (i32, i32) {
    %c0_i32 = arith.constant 0 : i32
    %c0_i32_0 = arith.constant 0 : i32
    return %arg0, %c0_i32 : i32, i32
  }
  func.func @transform_2(%arg0: i32, %arg1: i32) -> (i32, i32) {
    %c0_i32 = arith.constant 0 : i32
    return %arg0, %arg1 : i32, i32
  }
}

</mosaic_0001>

<llo_original>
// kernel: tpu_custom_call.1
$region0: #{tpu_custom_call.1}
  #allocation0 [shape = 'u32[]', space=smem, size = 0x4, offset = 0x4, fixed_abs, tag = 'smem constant byte address 0x4 - core index']
  #allocation1 [shape = 'u32[144,128]{1,0:T(1,128)}', space=vmem, size = 0x12000, scoped, tag = 'internal scratch']
  %s0 = inlined_call_operand.vmem [shape: u8[8,256], index: 0, kind: input, shape index: {}]
  %s1 = inlined_call_operand.vmem [shape: f32[8,1], index: 1, kind: input, shape index: {}]
  %s2 = inlined_call_operand.hbm [shape: f32[8,256], index: 2, kind: output, shape index: {}]
  %s3 = sld [smem:[#allocation0]]
  $region75: #{tpu_custom_call.1} parent=0
    _
  %s5 = ssub.s32 1, %s3
  %s6 = scalar_select 0, %s5, %s3
  $region1: #{tpu_custom_call.1} parent=0
    #allocation2 [shape = 'u8[8192]{0}', space=vmem, size = 0x2000, scoped, tag = 'input window, operand 0']
    #allocation3 [shape = 'u8[32768]{0}', space=vmem, size = 0x8000, scoped, tag = 'output window, operand 0']
    #allocation4 [shape = 's32[2]{0}', space=sflag, size = 0x8, scoped, tag = 'scoped memory for tpu_custom_call.1']
    %7 = vsyncpa [#allocation4], 0
    %s8 = scalar_lea.sflag [#allocation4], 1
    %9 = vsyncpa %s8, 0
    loop: start=0, step=1, limit=4
    $region2: #{tpu_custom_call.1} parent=1 // loop_pre_header
      _
    $region3: #{tpu_custom_call.1} parent=1 // loop_header
      %s11 = sphi 0, %s15
      %p12 = scmp.ge.s32.totalorder %s11, 4
      %s18 = sphi 0, %s30
      %s19 = sphi 0, %s26
      %s20 = sphi 0, %s18
      %s21 = sphi 0, %s19
      %s22 = sphi 0, %s20
      %s23 = sphi 0, %s21
      %s35 = sphi 0, %s37
      %s38 = sphi 0, %s35
      %s39 = sphi 0, %s38
      %s55 = sphi 0, %s39
      %s61 = sphi 0, %s63
      %s64 = sphi 0, %s61
      %s65 = sphi 0, %s64
      %s81 = sphi 0, %s65
      %s89 = sphi 0, %s91
      %s92 = sphi 0, %s89
      %s93 = sphi 0, %s92
      %s109 = sphi 0, %s93
    $region4: #{tpu_custom_call.1} parent=1 // loop_header_branch
      %14 = sbr.rel (%p12) target = $region8
    $region5: #{tpu_custom_call.1} parent=1 // loop_body
      %s16 = ssub.s32 %s11, 1
      %s17 = ssub.s32 %s11, 2
      %s24 = sadd.s32 1, %s19
      %p25 = scmp.ge.s32.totalorder %s24, 2
      %s26 = scalar_select %p25, 0, %s24
      %s27 = sadd.s32 1, %s18
      %s28 = scalar_select %p25, %s27, %s18
      %p29 = scmp.ge.s32.totalorder %s28, 1
      %s30 = scalar_select %p29, 0, %s28
      %s31 = ssub.s32 %s18, %s30
      %s32 = ssub.s32 %s19, %s26
      %s33 = sor.u32 %s31, %s32
      %p34 = scmp.eq.s32.totalorder %s33, 0
      %s36 = sadd.s32 %s35, 1
      %s37 = scalar_select %p34, %s35, %s36
      %p40 = pneg %p34
      %p41 = scmp.eq.s32.totalorder %s11, 1
      %p42 = por %p40, %p41
      %p43 = scmp.ne.s32.totalorder %s35, %s38
      %p44 = scmp.eq.s32.totalorder %s11, 0
      %p45 = por %p43, %p44
      %p46 = scmp.ne.s32.totalorder %s35, %s38
      %p47 = scmp.eq.s32.totalorder %s16, 1
      %p48 = por %p46, %p47
      %p49 = scmp.ne.s32.totalorder %s38, %s39
      %p50 = scmp.eq.s32.totalorder %s16, 0
      %p51 = por %p49, %p50
      %p52 = scmp.ne.s32.totalorder %s38, %s39
      %p53 = scmp.eq.s32.totalorder %s17, 1
      %p54 = por %p52, %p53
      %p56 = scmp.ne.s32.totalorder %s39, %s55
      %p57 = scmp.eq.s32.totalorder %s17, 0
      %p58 = por %p56, %p57
      %s59 = ssub.s32 %s18, %s30
      %p60 = scmp.eq.s32.totalorder %s59, 0
      %s62 = sadd.s32 %s61, 1
      %s63 = scalar_select %p60, %s61, %s62
      %p66 = pneg %p60
      %p67 = scmp.eq.s32.totalorder %s11, 1
      %p68 = por %p66, %p67
      %p69 = scmp.ne.s32.totalorder %s61, %s64
      %p70 = scmp.eq.s32.totalorder %s11, 0
      %p71 = por %p69, %p70
      %p72 = scmp.ne.s32.totalorder %s61, %s64
      %p73 = scmp.eq.s32.totalorder %s16, 1
      %p74 = por %p72, %p73
      %p75 = scmp.ne.s32.totalorder %s64, %s65
      %p76 = scmp.eq.s32.totalorder %s16, 0
      %p77 = por %p75, %p76
      %p78 = scmp.ne.s32.totalorder %s64, %s65
      %p79 = scmp.eq.s32.totalorder %s17, 1
      %p80 = por %p78, %p79
      %p82 = scmp.ne.s32.totalorder %s65, %s81
      %p83 = scmp.eq.s32.totalorder %s17, 0
      %p84 = por %p82, %p83
      %s85 = ssub.s32 %s18, %s30
      %s86 = ssub.s32 %s19, %s26
      %s87 = sor.u32 %s85, %s86
      %p88 = scmp.eq.s32.totalorder %s87, 0
      %s90 = sadd.s32 %s89, 1
      %s91 = scalar_select %p88, %s89, %s90
      %p94 = pneg %p88
      %p95 = scmp.eq.s32.totalorder %s11, 1
      %p96 = por %p94, %p95
      %p97 = scmp.ne.s32.totalorder %s89, %s92
      %p98 = scmp.eq.s32.totalorder %s11, 0
      %p99 = por %p97, %p98
      %p100 = scmp.ne.s32.totalorder %s89, %s92
      %p101 = scmp.eq.s32.totalorder %s16, 1
      %p102 = por %p100, %p101
      %p103 = scmp.ne.s32.totalorder %s92, %s93
      %p104 = scmp.eq.s32.totalorder %s16, 0
      %p105 = por %p103, %p104
      %p106 = scmp.ne.s32.totalorder %s92, %s93
      %p107 = scmp.eq.s32.totalorder %s17, 1
      %p108 = por %p106, %p107
      %p110 = scmp.ne.s32.totalorder %s93, %s109
      %p111 = scmp.eq.s32.totalorder %s17, 0
      %p112 = por %p110, %p111
      %p113 = scmp.le.s32.totalorder 1, %s11
      %p114 = scmp.lt.s32.totalorder %s11, 3
      %p115 = pnand %p113, %p114
      %p116 = pneg %p115
      // Predicated region
      $region9: #{tpu_custom_call.1} parent=5 // pred_check
        _
      $region10: #{tpu_custom_call.1} parent=5 // pred_check_branch
        %118 = sbr.rel (%p115) target = $region12
      $region11: #{tpu_custom_call.1} parent=5 // pred_region
        %s119 = ssub.s32 %s11, 1
        // Predicated region
        $region13: #{tpu_custom_call.1} parent=11 // pred_check
          %p120 = pneg %p77
        $region14: #{tpu_custom_call.1} parent=11 // pred_check_branch
          %122 = sbr.rel (%p120) target = $region16
        $region15: #{tpu_custom_call.1} parent=11 // pred_region
          %s123 = smul.u32 4, %s20
          %s124 = ssub.s32 1, %s123
          %s125 = smul.u32 128, %s124
          %p126 = scmp.lt.s32.totalorder %s123, 0
          %s127 = scalar_select %p126, %s123, 0
          %s128 = smul.addr %s127, 8
          %s129 = scalar_lea.vmem %s1, %s128
          %s130 = smul.u32 4, %s20
          %s131 = ssub.s32 1, %s130
          %s132 = smul.u32 128, %s131
        $region16: #{tpu_custom_call.1} parent=11 // pred_fallthru
          _
      $region12: #{tpu_custom_call.1} parent=5 // pred_fallthru
        _
      %p133 = scmp.lt.s32.totalorder %s11, 2
      // Predicated region
      $region17: #{tpu_custom_call.1} parent=5 // pred_check
        %p134 = pneg %p133
      $region18: #{tpu_custom_call.1} parent=5 // pred_check_branch
        %136 = sbr.rel (%p134) target = $region20
      $region19: #{tpu_custom_call.1} parent=5 // pred_region
        // Predicated region
        $region21: #{tpu_custom_call.1} parent=19 // pred_check
          %p137 = pneg %p45
        $region22: #{tpu_custom_call.1} parent=19 // pred_check_branch
          %139 = sbr.rel (%p137) target = $region24
        $region23: #{tpu_custom_call.1} parent=19 // pred_region
          %s140 = sand.u32 %s35, 1
          %s141 = sand.u32 %s35, 1
          %s142 = smul.addr %s141, 8
          %s143 = scalar_lea.vmem [#allocation2], %s142
          %s144 = smul.u32 4, %s18
          %s145 = ssub.s32 1, %s144
          %s146 = smul.u32 32, %s145
          %p147 = scmp.ne.s32.totalorder 0, %s146
          %s148 = smul.addr %s144, 2
          %s149 = sadd.s32 %s19, %s148
          %s150 = smul.addr %s149, 2
          %s151 = scalar_lea.vmem %s0, %s150
          // Predicated region
          $region25: #{tpu_custom_call.1} parent=23 // pred_check
            %p152 = pneg %p147
          $region26: #{tpu_custom_call.1} parent=23 // pred_check_branch
            %154 = sbr.rel (%p152) target = $region28
          $region27: #{tpu_custom_call.1} parent=23 // pred_region
            // Predicated region
            $region29: #{tpu_custom_call.1} parent=27 // pred_check
              _
            $region30: #{tpu_custom_call.1} parent=27 // pred_check_branch
              %156 = sbr.rel target = $region32
            $region31: #{tpu_custom_call.1} parent=27 // pred_region
              // Predicated region
              $region44: #{tpu_custom_call.1} parent=31 // pred_check
                _
              $region45: #{tpu_custom_call.1} parent=31 // pred_check_branch
                %180 = sbr.rel (0) target = $region47
              $region46: #{tpu_custom_call.1} parent=31 // pred_region
                %s182 = ssub.s32 4, 1
                // While loop
                $region48: #{tpu_custom_call.1} parent=46 // loop_pre_header
                  _
                $region49: #{tpu_custom_call.1} parent=46 // loop_header
                  %s184 = sphi 0, %s186
                  %p185 = scmp.ge.s32.totalorder %s184, %s145
                  %s189 = sphi 0, %s196
                  %s190 = sphi %s151, %s199
                  %s191 = sphi %s143, %s200
                $region50: #{tpu_custom_call.1} parent=46 // loop_header_branch
                  %188 = sbr.rel (%p185) target = $region54
                $region51: #{tpu_custom_call.1} parent=46 // loop_body
                  %v192 = vld [vmem:[%s190] sm:%s182]
                  %193 = vst [vmem:[%s191] sm:%s182] %v192
                  %s194 = sadd.s32 1, %s189
                  %p195 = scmp.ge.s32.totalorder %s194, %s145
                  %s196 = scalar_select %p195, 0, %s194
                  %s197 = smul.u32 %s196, 4
                  %s198 = smul.u32 %s196, 2
                  %s199 = scalar_lea.vmem %s151, %s197
                  %s200 = scalar_lea.vmem %s143, %s198 [#allocation2]
                $region52: #{tpu_custom_call.1} parent=46 // loop_footer
                  %s186 = sadd.s32 %s184, 1
                $region53: #{tpu_custom_call.1} parent=46 // loop_footer_branch
                  %183 = sbr.rel target = $region49
                $region54: #{tpu_custom_call.1} parent=46 // loop_exit
                  _
              $region47: #{tpu_custom_call.1} parent=31 // pred_fallthru
                _
            $region32: #{tpu_custom_call.1} parent=27 // pred_fallthru
              _
            // Predicated region
            $region33: #{tpu_custom_call.1} parent=27 // pred_check
              _
            $region34: #{tpu_custom_call.1} parent=27 // pred_check_branch
              %158 = sbr.rel (0) target = $region36
            $region35: #{tpu_custom_call.1} parent=27 // pred_region
              %s160 = ssub.s32 4, 1
              // While loop
              $region37: #{tpu_custom_call.1} parent=35 // loop_pre_header
                _
              $region38: #{tpu_custom_call.1} parent=35 // loop_header
                %s162 = sphi 0, %s164
                %p163 = scmp.ge.s32.totalorder %s162, %s145
                %s167 = sphi 0, %s174
                %s168 = sphi %s151, %s177
                %s169 = sphi %s143, %s178
              $region39: #{tpu_custom_call.1} parent=35 // loop_header_branch
                %166 = sbr.rel (%p163) target = $region43
              $region40: #{tpu_custom_call.1} parent=35 // loop_body
                %v170 = vld [vmem:[%s168] sm:%s160]
                %171 = vst [vmem:[%s169] sm:%s160] %v170
                %s172 = sadd.s32 1, %s167
                %p173 = scmp.ge.s32.totalorder %s172, %s145
                %s174 = scalar_select %p173, 0, %s172
                %s175 = smul.u32 %s174, 4
                %s176 = smul.u32 %s174, 2
                %s177 = scalar_lea.vmem %s151, %s175
                %s178 = scalar_lea.vmem %s143, %s176 [#allocation2]
              $region41: #{tpu_custom_call.1} parent=35 // loop_footer
                %s164 = sadd.s32 %s162, 1
              $region42: #{tpu_custom_call.1} parent=35 // loop_footer_branch
                %161 = sbr.rel target = $region38
              $region43: #{tpu_custom_call.1} parent=35 // loop_exit
                _
            $region36: #{tpu_custom_call.1} parent=27 // pred_fallthru
              _
          $region28: #{tpu_custom_call.1} parent=23 // pred_fallthru
            _
          %201 = vnop
        $region24: #{tpu_custom_call.1} parent=19 // pred_fallthru
          _
      $region20: #{tpu_custom_call.1} parent=5 // pred_fallthru
        _
      %p202 = scmp.le.s32.totalorder 1, %s11
      %p203 = scmp.lt.s32.totalorder %s11, 3
      %p204 = pnand %p202, %p203
      %p205 = pneg %p204
      // Predicated region
      $region55: #{tpu_custom_call.1} parent=5 // pred_check
        _
      $region56: #{tpu_custom_call.1} parent=5 // pred_check_branch
        %207 = sbr.rel (%p204) target = $region58
      $region57: #{tpu_custom_call.1} parent=5 // pred_region
        %s208 = ssub.s32 %s11, 1
        %s209 = sand.u32 %s38, 1
        %s210 = sand.u32 %s38, 1
        %s211 = smul.addr %s210, 8
        %s212 = scalar_lea.vmem [#allocation2], %s211
        // Predicated region
        $region59: #{tpu_custom_call.1} parent=57 // pred_check
          %p213 = pneg %p51
        $region60: #{tpu_custom_call.1} parent=57 // pred_check_branch
          %215 = sbr.rel (%p213) target = $region62
        $region61: #{tpu_custom_call.1} parent=57 // pred_region
          _
        $region62: #{tpu_custom_call.1} parent=57 // pred_fallthru
          _
        %s216 = sand.u32 %s38, 1
        %s217 = sand.u32 %s38, 1
        %s218 = smul.addr %s217, 8
        %s219 = scalar_lea.vmem [#allocation2], %s218
        %p220 = pneg %p51
        %p221 = pneg %p48
        %s222 = smul.u32 4, %s20
        %s223 = ssub.s32 1, %s222
        %s224 = smul.u32 128, %s223
        %p225 = scmp.lt.s32.totalorder %s222, 0
        %s226 = scalar_select %p225, %s222, 0
        %s227 = smul.addr %s226, 8
        %s228 = scalar_lea.vmem %s1, %s227
        %p229 = pneg %p77
        %p230 = pneg %p74
        %p231 = pneg %p105
        %p232 = pneg %p102
        %s233 = sand.u32 %s92, 1
        %s234 = scalar_lea.sflag [#allocation4], %s233
        %s235 = sand.u32 %s92, 1
        %s236 = smul.addr %s235, 32
        %s237 = scalar_lea.vmem [#allocation3], %s236
        %s238 = smul.u32 4, %s20
        %s239 = ssub.s32 1, %s238
        %s240 = smul.u32 32, %s239
        %s241 = smul.u32 4, %s20
        %s242 = ssub.s32 1, %s241
        %s243 = smul.u32 128, %s242
        %p244 = scmp.lt.s32.totalorder %s241, 0
        %s245 = scalar_select %p244, %s241, 0
        %s246 = smul.addr %s245, 8
        %s247 = scalar_lea.vmem %s1, %s246
        %s248 = smul.u32 4, %s20
        %s249 = ssub.s32 1, %s248
        %s250 = smul.u32 128, %s249
        %s251 = smul.u32 4, %s20
        %s252 = ssub.s32 1, %s251
        %s253 = smul.u32 128, %s252
        %v254 = vld [vmem:[%s212] sm:$0x3]
        %v255 = vld [vmem:[%s212 + $0x2] sm:$0x3]
        %v256 = vld [vmem:[%s212 + $0x4] sm:$0x3]
        %v257 = vld [vmem:[%s212 + $0x6] sm:$0x3]
        %v258 = vunpack.c.0.s8 %v254
        %v259 = vunpack.c.0.s8 %v255
        %v260 = vunpack.c.0.s8 %v256
        %v261 = vunpack.c.0.s8 %v257
        %v262 = vand.u32 %v258, 255
        %v263 = vand.u32 %v259, 255
        %v264 = vand.u32 %v260, 255
        %v265 = vand.u32 %v261, 255
        %v266 = vcvt.s32.f32 %v262
        %v267 = vcvt.s32.f32 %v263
        %v268 = vcvt.s32.f32 %v264
        %v269 = vcvt.s32.f32 %v265
        %v270 = vld [vmem:[%s247] sm:$0xff]
        %v271 = vld [vmem:[%s247 + $0x8] sm:$0xff]
        %v272 = vld [vmem:[%s247 + $0x10] sm:$0xff]
        %v273 = vld [vmem:[%s247 + $0x18] sm:$0xff]
        %275 = vset.pattern.permute.xlu0 0
        %276 = vperm.xlu0 %275, %v270
        %v277 = vpop.permute.xlu0 %276
        %280 = vset.pattern.permute.xlu0 0
        %281 = vperm.xlu0 %280, %v271
        %v282 = vpop.permute.xlu0 %281
        %285 = vset.pattern.permute.xlu0 0
        %286 = vperm.xlu0 %285, %v272
        %v287 = vpop.permute.xlu0 %286
        %290 = vset.pattern.permute.xlu0 0
        %291 = vperm.xlu0 %290, %v273
        %v292 = vpop.permute.xlu0 %291
        %v294 = vsub.f32 %v266, %v277
        %v295 = vsub.f32 %v267, %v282
        %v296 = vsub.f32 %v268, %v287
        %v297 = vsub.f32 %v269, %v292
        %298 = vst [vmem:[%s237] sm:$0xff] %v294
        %299 = vst [vmem:[%s237 + $0x8] sm:$0xff] %v295
        %300 = vst [vmem:[%s237 + $0x10] sm:$0xff] %v296
        %301 = vst [vmem:[%s237 + $0x18] sm:$0xff] %v297
        %s302 = sand.u32 %s92, 1
        %s303 = scalar_lea.sflag [#allocation4], %s302
        %s304 = sand.u32 %s92, 1
        %s305 = smul.addr %s304, 32
        %s306 = scalar_lea.vmem [#allocation3], %s305
        // Predicated region
        $region63: #{tpu_custom_call.1} parent=57 // pred_check
          %p307 = pneg %p102
        $region64: #{tpu_custom_call.1} parent=57 // pred_check_branch
          %309 = sbr.rel (%p307) target = $region66
        $region65: #{tpu_custom_call.1} parent=57 // pred_region
          %s310 = smul.u32 4, %s20
          %s311 = ssub.s32 1, %s310
          %s312 = smul.u32 128, %s311
          %s314 = ssub.s32 512, %s312
          %315 = vsyncadd %s303, %s314
          %p316 = scmp.ne.s32.totalorder 0, %s312
          %s317 = smul.addr %s310, 2
          %s318 = sadd.s32 %s21, %s317
          %s319 = smul.addr %s318, 128
          %s320 = scalar_lea.hbm %s2, %s319
          %s321 = smul.u32 8, %s311
          %s322 = sshll.u32 %s306, 4
          %s323 = int_to_ptr.vmem [resolvable:$true] %s322
          %s324 = sshll.u32 %s321, 4
          %328 = dma.vmem_to_hbm [thread:$0]  (%p316), %s323, %s324, %s320, %s303, 128, 256, 8
        $region66: #{tpu_custom_call.1} parent=57 // pred_fallthru
          _
      $region58: #{tpu_custom_call.1} parent=5 // pred_fallthru
        _
      %p329 = scmp.le.s32.totalorder 2, %s11
      // Predicated region
      $region67: #{tpu_custom_call.1} parent=5 // pred_check
        %p330 = pneg %p329
      $region68: #{tpu_custom_call.1} parent=5 // pred_check_branch
        %332 = sbr.rel (%p330) target = $region70
      $region69: #{tpu_custom_call.1} parent=5 // pred_region
        %s333 = ssub.s32 %s11, 2
        // Predicated region
        $region71: #{tpu_custom_call.1} parent=69 // pred_check
          %p334 = pneg %p108
        $region72: #{tpu_custom_call.1} parent=69 // pred_check_branch
          %336 = sbr.rel (%p334) target = $region74
        $region73: #{tpu_custom_call.1} parent=69 // pred_region
          %s337 = sand.u32 %s93, 1
          %s338 = scalar_lea.sflag [#allocation4], %s337
          %s339 = sand.u32 %s93, 1
          %s340 = smul.addr %s339, 32
          %s341 = scalar_lea.vmem [#allocation3], %s340
          %342 = dma.done %s338, 512
        $region74: #{tpu_custom_call.1} parent=69 // pred_fallthru
          _
      $region70: #{tpu_custom_call.1} parent=5 // pred_fallthru
        _
    $region6: #{tpu_custom_call.1} parent=1 // loop_footer
      %s15 = sadd.s32 1, %s11
    $region7: #{tpu_custom_call.1} parent=1 // loop_footer_branch
      %10 = sbr.rel target = $region3
    $region8: #{tpu_custom_call.1} parent=1 // loop_exit
      _
    %343 = vsyncpa [#allocation4], 1
    %s344 = scalar_lea.sflag [#allocation4], 1
    %345 = vsyncpa %s344, 1

</llo_original>
